<compile_context>
chip_gen: v7x
topology: tpu7x:2x2x1
jax: 0.10.0
libtpu: 0.0.40
codegen_flags: <defaults>
</compile_context>

<pallas_src>
from functools import partial

import jax
import jax.numpy as jnp
from jax.experimental import pallas as pl
from jax.experimental.pallas import tpu as pltpu


# ----------------------------------------------------------------------------
# Helpers
# ----------------------------------------------------------------------------

def _round_up(x, m):
    return -(-int(x) // m) * m


def _choose_block_b(B):
    """Batch tile: >=2 balanced grid steps when B > 8 (v7x megacore), <=1024
    rows/step (amortizes per-step overhead without blowing VMEM)."""
    Bp8 = _round_up(max(int(B), 1), 8)
    if Bp8 <= 8:
        return 8
    half = _round_up(Bp8 // 2, 8)
    return max(8, min(1024, half))


_BUFFERED1_OK = None


def _buffered_one_supported():
    """One-time probe: does this JAX accept pipeline_mode=pl.Buffered(1)?"""
    global _BUFFERED1_OK
    if _BUFFERED1_OK is None:
        def _copy(x_ref, o_ref):
            o_ref[...] = x_ref[...]
        try:
            f = pl.pallas_call(
                _copy,
                out_shape=jax.ShapeDtypeStruct((16, 128), jnp.float32),
                grid=(2,),
                in_specs=[pl.BlockSpec((8, 128), lambda i: (0, 0),
                                       pipeline_mode=pl.Buffered(1))],
                out_specs=pl.BlockSpec((8, 128), lambda i: (i, 0)),
            )
            jax.block_until_ready(f(jnp.ones((8, 128), jnp.float32)))
            _BUFFERED1_OK = True
        except Exception:
            _BUFFERED1_OK = False
    return _BUFFERED1_OK


# ----------------------------------------------------------------------------
# Fused kernel
# ----------------------------------------------------------------------------

def _layernorm(h, gamma, beta, eps=1e-5):
    # PyTorch nn.LayerNorm: biased variance over the last dim, eps=1e-5.
    mu = jnp.mean(h, axis=-1, keepdims=True)
    var = jnp.mean((h - mu) ** 2, axis=-1, keepdims=True)
    return (h - mu) * jax.lax.rsqrt(var + eps) * gamma + beta


def fused_kernel(x_ref,
                 w1_ref, b1_ref, g1_ref, be1_ref,
                 w2_ref, b2_ref, g2_ref, be2_ref,
                 mw1_ref, mb1_ref, mw2_ref, mb2_ref,
                 o_ref):
    """Encoder + all mask-net heads, fully fused.

    x -> Linear(D,256) -> LN -> ReLU -> Linear(256,128) -> LN -> ReLU  = f
    f -> Linear(128, 128*N) (+ env-folded bias) -> ReLU
      -> block-diag Linear(128*N, total_pad) -> Sigmoid                = slab

    MXU operands are cast to the weight dtype (bf16 fast path); LayerNorm,
    ReLU and sigmoid stay in f32 (v5e has no bf16 VPU/EUP).  Accumulation is
    always f32 via preferred_element_type.
    """
    wdt = w1_ref.dtype
    x = x_ref[...].astype(wdt)

    h = jnp.dot(x, w1_ref[...], preferred_element_type=jnp.float32) + b1_ref[...]
    h = _layernorm(h, g1_ref[...], be1_ref[...])
    h = jnp.maximum(h, 0.0)

    f = jnp.dot(h.astype(wdt), w2_ref[...],
                preferred_element_type=jnp.float32) + b2_ref[...]
    f = _layernorm(f, g2_ref[...], be2_ref[...])
    f = jnp.maximum(f, 0.0)

    g = jnp.dot(f.astype(wdt), mw1_ref[...],
                preferred_element_type=jnp.float32) + mb1_ref[...]
    g = jnp.maximum(g, 0.0)

    z = jnp.dot(g.astype(wdt), mw2_ref[...],
                preferred_element_type=jnp.float32) + mb2_ref[...]
    o_ref[...] = jax.nn.sigmoid(z)


# ----------------------------------------------------------------------------
# Jitted wrapper
# ----------------------------------------------------------------------------

@partial(jax.jit, static_argnames=("block_b", "single_buffer_weights"))
def run_fused(x, enc, mw1, mb1, mw2, mb2, *, block_b=None,
              single_buffer_weights=True):
    B, D = x.shape
    total_pad = mw2.shape[1]

    bb = _choose_block_b(B) if block_b is None else max(8, (int(block_b) // 8) * 8)
    Bp = _round_up(B, bb)
    xp = x if Bp == B else jnp.pad(x, ((0, Bp - B), (0, 0)))

    args = (xp,
            enc["w1"], enc["b1"], enc["g1"], enc["be1"],
            enc["w2"], enc["b2"], enc["g2"], enc["be2"],
            mw1, mb1, mw2, mb2)

    # Weights map to block (0, 0) every step -> resident in VMEM; single-buffer
    # them (no benefit from double-buffering a never-changing block).
    if single_buffer_weights:
        def wspec(a):
            return pl.BlockSpec(a.shape, lambda i: (0, 0),
                                pipeline_mode=pl.Buffered(1))
    else:
        def wspec(a):
            return pl.BlockSpec(a.shape, lambda i: (0, 0))

    in_specs = [pl.BlockSpec((bb, D), lambda i: (i, 0))]
    in_specs += [wspec(a) for a in args[1:]]
    out_spec = pl.BlockSpec((bb, total_pad), lambda i: (i, 0))

    # Scoped-VMEM budget: weights (x2 if double-buffered) + double-buffered
    # activation/output tiles + in-kernel intermediates, with headroom.
    wbuf = 1 if single_buffer_weights else 2
    weight_bytes = wbuf * sum(int(a.size) * a.dtype.itemsize for a in args[1:])
    act_bytes = 2 * bb * (D * x.dtype.itemsize + total_pad * 4)
    inter_bytes = bb * (256 + 128 + mw1.shape[1] + total_pad) * 6
    vmem_limit = int(min(64 * 2**20,
                         max(32 * 2**20,
                             weight_bytes + act_bytes + inter_bytes + (4 << 20))))

    out = pl.pallas_call(
        fused_kernel,
        out_shape=jax.ShapeDtypeStruct((Bp, total_pad), jnp.float32),
        grid=(Bp // bb,),
        in_specs=in_specs,
        out_specs=out_spec,
        compiler_params=pltpu.CompilerParams(
            dimension_semantics=("parallel",),
            vmem_limit_bytes=vmem_limit),
    )(*args)
    return out[:B]


# ----------------------------------------------------------------------------
# Parameter construction (deterministic, mirrors MaskGenerator.__init__)
# ----------------------------------------------------------------------------

def _orthogonal(key, in_dim, out_dim):
    # PyTorch stores Linear weights as (out, in) with orthogonal init and
    # computes y = x @ W.T + b.  We store the (in, out) transpose directly.
    w = jax.nn.initializers.orthogonal()(key, (out_dim, in_dim), jnp.float32)
    return w.T


def build_params(key, state_dims, hidden_dims_list, num_environments):
    params = {"encoders": [], "env_embeddings": None, "mask_nets": []}
    keys = jax.random.split(key, 1 + len(state_dims) + num_environments)
    k_emb, k_rest = keys[0], keys[1:]

    # env_embeddings ~ randn(num_environments, 64)
    params["env_embeddings"] = jax.random.normal(
        k_emb, (num_environments, 64), jnp.float32)

    # encoders: Linear(D,256) + LN(256) + Linear(256,128) + LN(128)
    for i, sd in enumerate(state_dims):
        ek = jax.random.split(k_rest[i], 2)
        params["encoders"].append(dict(
            w1=_orthogonal(ek[0], sd, 256), b1=jnp.zeros((1, 256), jnp.float32),
            g1=jnp.ones((1, 256), jnp.float32), be1=jnp.zeros((1, 256), jnp.float32),
            w2=_orthogonal(ek[1], 256, 128), b2=jnp.zeros((1, 128), jnp.float32),
            g2=jnp.ones((1, 128), jnp.float32), be2=jnp.zeros((1, 128), jnp.float32),
        ))

    # mask_nets[env_id][i]: Linear(192,128) + Linear(128, dim)
    for env_id in range(num_environments):
        mk = jax.random.split(k_rest[len(state_dims) + env_id],
                              2 * max(1, len(hidden_dims_list[env_id])))
        nets = []
        for i, dim in enumerate(hidden_dims_list[env_id]):
            nets.append(dict(
                w1=_orthogonal(mk[2 * i], 128 + 64, 128),
                b1=jnp.zeros((1, 128), jnp.float32),
                w2=_orthogonal(mk[2 * i + 1], 128, dim),
                b2=jnp.zeros((1, dim), jnp.float32),
            ))
        params["mask_nets"].append(nets)
    return params


def prepare_fused_env_params(params, env_id, *, weight_dtype=jnp.bfloat16):
    """Fold the env embedding into the heads' first-layer bias and pack all
    heads into one lane-dense weight set (first layer concatenated along
    outputs, second layer block-diagonal, output padded to a multiple of 128).
    MXU operand weights are cast to `weight_dtype`; biases/LN params stay f32."""
    enc0 = params["encoders"][env_id]
    env_emb = params["env_embeddings"][env_id][None, :]          # (1, 64)
    nets = params["mask_nets"][env_id]
    n_heads = len(nets)
    dims = [int(n["w2"].shape[1]) for n in nets]
    total = sum(dims)
    total_pad = max(128, _round_up(total, 128))

    # First mask layer over features only (K=128); env part folded into bias.
    mw1 = jnp.concatenate([n["w1"][:128, :] for n in nets], axis=1)    # (128, 128*N)
    mb1 = jnp.concatenate(
        [n["b1"] + env_emb @ n["w1"][128:, :] for n in nets], axis=1)  # (1, 128*N)

    # Second mask layer: block-diagonal, lane-padded output.
    mw2 = jnp.zeros((128 * n_heads, total_pad), jnp.float32)
    mb2 = jnp.zeros((1, total_pad), jnp.float32)
    offsets = []
    off = 0
    for i, n in enumerate(nets):
        d = dims[i]
        mw2 = mw2.at[i * 128:(i + 1) * 128, off:off + d].set(n["w2"])
        mb2 = mb2.at[:, off:off + d].set(n["b2"])
        offsets.append(off)
        off += d

    enc = dict(enc0)
    enc["w1"] = enc0["w1"].astype(weight_dtype)
    enc["w2"] = enc0["w2"].astype(weight_dtype)
    mw1 = mw1.astype(weight_dtype)
    mw2 = mw2.astype(weight_dtype)

    return dict(enc=enc, mw1=mw1, mb1=mb1, mw2=mw2, mb2=mb2,
                dims=dims, offsets=offsets, total_pad=total_pad)


# ----------------------------------------------------------------------------
# Forward (per-env packed params cached once; pallas wrapper jitted)
# ----------------------------------------------------------------------------

class FusedMaskGenerator:
    def __init__(self, params, *, weight_dtype=jnp.bfloat16):
        self.params = params
        self.weight_dtype = weight_dtype
        self._env_cache = {}

    def _env(self, env_id):
        if env_id not in self._env_cache:
            self._env_cache[env_id] = prepare_fused_env_params(
                self.params, env_id, weight_dtype=self.weight_dtype)
        return self._env_cache[env_id]

    def __call__(self, state, env_id, *, block_b=None):
        fp = self._env(env_id)
        slab = run_fused(state, fp["enc"], fp["mw1"], fp["mb1"],
                         fp["mw2"], fp["mb2"], block_b=block_b,
                         single_buffer_weights=_buffered_one_supported())
        return [slab[:, o:o + d] for o, d in zip(fp["offsets"], fp["dims"])]


# Plain-JAX reference for verification (mirrors the PyTorch module exactly).
def _reference_forward(params, state, env_id):
    enc = params["encoders"][env_id]

    def ln(h, g, b):
        mu = jnp.mean(h, axis=-1, keepdims=True)
        var = jnp.mean((h - mu) ** 2, axis=-1, keepdims=True)
        return (h - mu) / jnp.sqrt(var + 1e-5) * g + b

    h = jnp.maximum(ln(state @ enc["w1"] + enc["b1"], enc["g1"], enc["be1"]), 0.0)
    feats = jnp.maximum(ln(h @ enc["w2"] + enc["b2"], enc["g2"], enc["be2"]), 0.0)
    B = state.shape[0]
    emb = jnp.broadcast_to(params["env_embeddings"][env_id][None, :], (B, 64))
    combined = jnp.concatenate([feats, emb], axis=1)
    outs = []
    for n in params["mask_nets"][env_id]:
        h = jnp.maximum(combined @ n["w1"] + n["b1"], 0.0)
        outs.append(jax.nn.sigmoid(h @ n["w2"] + n["b2"]))
    return outs


if __name__ == "__main__":
    # Small, forward-consistent shapes.
    state_dims = [16, 12]
    hidden_dims_list = [[64, 32], [48]]
    num_environments = 2
    batch = 8

    key = jax.random.PRNGKey(0)
    k_params, k_s0, k_s1 = jax.random.split(key, 3)
    params = build_params(k_params, state_dims, hidden_dims_list, num_environments)

    states = {
        0: jax.random.normal(k_s0, (batch, state_dims[0]), jnp.float32),
        1: jax.random.normal(k_s1, (batch, state_dims[1]), jnp.float32),
    }

    # f32 weights: bit-tight check.  bf16 weights: MXU fast path, loose check.
    gen_f32 = FusedMaskGenerator(params, weight_dtype=jnp.float32)
    gen_bf16 = FusedMaskGenerator(params, weight_dtype=jnp.bfloat16)

    for env_id in (0, 1):
        state = states[env_id]
        ref = _reference_forward(params, state, env_id)

        masks = [jax.block_until_ready(m) for m in gen_f32(state, env_id)]
        for m, r, dim in zip(masks, ref, hidden_dims_list[env_id]):
            assert m.shape == (batch, dim), (m.shape, (batch, dim))
            assert jnp.allclose(m, r, rtol=1e-4, atol=1e-5), \
                f"f32 mismatch vs reference for env {env_id}"

        masks = [jax.block_until_ready(m) for m in gen_bf16(state, env_id)]
        for m, r, dim in zip(masks, ref, hidden_dims_list[env_id]):
            assert m.shape == (batch, dim), (m.shape, (batch, dim))
            assert jnp.allclose(m, r, rtol=3e-2, atol=3e-2), \
                f"bf16 mismatch vs reference for env {env_id}"

    print("KERNEL_OK")
</pallas_src>

<mosaic_0001>
module attributes {stable_mosaic.version = 11 : i64} {
  func.func @_copy(%arg0: i32, %arg1: memref<8x128xf32, #tpu.memory_space<vmem>>, %arg2: memref<8x128xf32, #tpu.memory_space<vmem>>) attributes {dimension_semantics = [#tpu.dimension_semantics<arbitrary>], iteration_bounds = array<i64: 2>, scalar_prefetch = 0 : i64, scratch_operands = 0 : i64, tpu.core_type = #tpu.core_type<tc>, window_params = [{pipeline_mode = #tpu.pipeline_mode<synchronous>, transform_indices = @transform_0, window_bounds = array<i64: 8, 128>}, {transform_indices = @transform_1, window_bounds = array<i64: 8, 128>}]} {
    %c0 = arith.constant 0 : index
    %c0_0 = arith.constant 0 : index
    %0 = vector.load %arg1[%c0, %c0_0] : memref<8x128xf32, #tpu.memory_space<vmem>>, vector<8x128xf32>
    %c0_1 = arith.constant 0 : index
    %c0_2 = arith.constant 0 : index
    %1 = vector.load %arg2[%c0_1, %c0_2] : memref<8x128xf32, #tpu.memory_space<vmem>>, vector<8x128xf32>
    tpu.vector_store %arg2[%c0_1, %c0_2], %0 {strides = array<i32>} : memref<8x128xf32, #tpu.memory_space<vmem>>, vector<8x128xf32>,
    return
  }
  func.func @transform_0(%arg0: i32) -> (i32, i32) {
    %c0_i32 = arith.constant 0 : i32
    %c0_i32_0 = arith.constant 0 : i32
    %c0_i32_1 = arith.constant 0 : i32
    return %c0_i32, %c0_i32_0 : i32, i32
  }
  func.func @transform_1(%arg0: i32) -> (i32, i32) {
    %c0_i32 = arith.constant 0 : i32
    %c0_i32_0 = arith.constant 0 : i32
    return %arg0, %c0_i32 : i32, i32
  }
}

module attributes {stable_mosaic.version = 11 : i64} {
  func.func @fused_kernel(%arg0: i32, %arg1: memref<8x16xf32, #tpu.memory_space<vmem>>, %arg2: memref<16x256xf32, #tpu.memory_space<vmem>>, %arg3: memref<1x256xf32, #tpu.memory_space<vmem>>, %arg4: memref<1x256xf32, #tpu.memory_space<vmem>>, %arg5: memref<1x256xf32, #tpu.memory_space<vmem>>, %arg6: memref<256x128xf32, #tpu.memory_space<vmem>>, %arg7: memref<1x128xf32, #tpu.memory_space<vmem>>, %arg8: memref<1x128xf32, #tpu.memory_space<vmem>>, %arg9: memref<1x128xf32, #tpu.memory_space<vmem>>, %arg10: memref<128x256xf32, #tpu.memory_space<vmem>>, %arg11: memref<1x256xf32, #tpu.memory_space<vmem>>, %arg12: memref<256x128xf32, #tpu.memory_space<vmem>>, %arg13: memref<1x128xf32, #tpu.memory_space<vmem>>, %arg14: memref<8x128xf32, #tpu.memory_space<vmem>>) attributes {dimension_semantics = [#tpu.dimension_semantics<parallel>], iteration_bounds = array<i64: 1>, scalar_prefetch = 0 : i64, scratch_operands = 0 : i64, tpu.core_type = #tpu.core_type<tc>, window_params = [{transform_indices = @transform_0, window_bounds = array<i64: 8, 16>}, {pipeline_mode = #tpu.pipeline_mode<synchronous>, transform_indices = @transform_1, window_bounds = array<i64: 16, 256>}, {pipeline_mode = #tpu.pipeline_mode<synchronous>, transform_indices = @transform_2, window_bounds = array<i64: 1, 256>}, {pipeline_mode = #tpu.pipeline_mode<synchronous>, transform_indices = @transform_3, window_bounds = array<i64: 1, 256>}, {pipeline_mode = #tpu.pipeline_mode<synchronous>, transform_indices = @transform_4, window_bounds = array<i64: 1, 256>}, {pipeline_mode = #tpu.pipeline_mode<synchronous>, transform_indices = @transform_5, window_bounds = array<i64: 256, 128>}, {pipeline_mode = #tpu.pipeline_mode<synchronous>, transform_indices = @transform_6, window_bounds = array<i64: 1, 128>}, {pipeline_mode = #tpu.pipeline_mode<synchronous>, transform_indices = @transform_7, window_bounds = array<i64: 1, 128>}, {pipeline_mode = #tpu.pipeline_mode<synchronous>, transform_indices = @transform_8, window_bounds = array<i64: 1, 128>}, {pipeline_mode = #tpu.pipeline_mode<synchronous>, transform_indices = @transform_9, window_bounds = array<i64: 128, 256>}, {pipeline_mode = #tpu.pipeline_mode<synchronous>, transform_indices = @transform_10, window_bounds = array<i64: 1, 256>}, {pipeline_mode = #tpu.pipeline_mode<synchronous>, transform_indices = @transform_11, window_bounds = array<i64: 256, 128>}, {pipeline_mode = #tpu.pipeline_mode<synchronous>, transform_indices = @transform_12, window_bounds = array<i64: 1, 128>}, {transform_indices = @transform_13, window_bounds = array<i64: 8, 128>}]} {
    %c0 = arith.constant 0 : index
    %c0_0 = arith.constant 0 : index
    %0 = vector.load %arg1[%c0, %c0_0] : memref<8x16xf32, #tpu.memory_space<vmem>>, vector<8x16xf32>
    %c0_1 = arith.constant 0 : index
    %c0_2 = arith.constant 0 : index
    %1 = vector.load %arg2[%c0_1, %c0_2] : memref<16x256xf32, #tpu.memory_space<vmem>>, vector<16x256xf32>
    %cst = arith.constant dense<0.000000e+00> : vector<8x256xf32>
    %2 = tpu.matmul %0, %1, %cst {dimension_numbers = #tpu.dot_dimension_numbers<[1], [0], [0], [1], [0, 0, 1, 1], [], []>} : vector<8x16xf32>, vector<16x256xf32>, vector<8x256xf32> -> vector<8x256xf32>
    %c0_3 = arith.constant 0 : index
    %c0_4 = arith.constant 0 : index
    %3 = vector.load %arg3[%c0_3, %c0_4] : memref<1x256xf32, #tpu.memory_space<vmem>>, vector<1x256xf32>
    %4 = vector.broadcast %3 : vector<1x256xf32> to vector<8x256xf32>
    %5 = arith.addf %2, %4 : vector<8x256xf32>
    %c0_5 = arith.constant 0 : index
    %c0_6 = arith.constant 0 : index
    %6 = vector.load %arg4[%c0_5, %c0_6] : memref<1x256xf32, #tpu.memory_space<vmem>>, vector<1x256xf32>
    %c0_7 = arith.constant 0 : index
    %c0_8 = arith.constant 0 : index
    %7 = vector.load %arg5[%c0_7, %c0_8] : memref<1x256xf32, #tpu.memory_space<vmem>>, vector<1x256xf32>
    %cst_9 = arith.constant dense<0.000000e+00> : vector<8xf32>
    %8 = vector.multi_reduction <add>, %5, %cst_9 [1] : vector<8x256xf32> to vector<8xf32>
    %9 = vector.shape_cast %8 : vector<8xf32> to vector<8x1xf32>
    %cst_10 = arith.constant 2.560000e+02 : f32
    %10 = vector.broadcast %cst_10 : f32 to vector<8x1xf32>
    %11 = arith.divf %9, %10 : vector<8x1xf32>
    %12 = vector.broadcast %11 : vector<8x1xf32> to vector<8x256xf32>
    %13 = arith.subf %5, %12 : vector<8x256xf32>
    %14 = arith.mulf %13, %13 : vector<8x256xf32>
    %cst_11 = arith.constant dense<0.000000e+00> : vector<8xf32>
    %15 = vector.multi_reduction <add>, %14, %cst_11 [1] : vector<8x256xf32> to vector<8xf32>
    %16 = vector.shape_cast %15 : vector<8xf32> to vector<8x1xf32>
    %cst_12 = arith.constant 2.560000e+02 : f32
    %17 = vector.broadcast %cst_12 : f32 to vector<8x1xf32>
    %18 = arith.divf %16, %17 : vector<8x1xf32>
    %19 = vector.broadcast %11 : vector<8x1xf32> to vector<8x256xf32>
    %20 = arith.subf %5, %19 : vector<8x256xf32>
    %cst_13 = arith.constant 9.99999974E-6 : f32
    %21 = vector.broadcast %cst_13 : f32 to vector<8x1xf32>
    %22 = arith.addf %18, %21 : vector<8x1xf32>
    %23 = math.rsqrt %22 : vector<8x1xf32>
    %24 = vector.broadcast %23 : vector<8x1xf32> to vector<8x256xf32>
    %25 = arith.mulf %20, %24 : vector<8x256xf32>
    %26 = vector.broadcast %6 : vector<1x256xf32> to vector<8x256xf32>
    %27 = arith.mulf %25, %26 : vector<8x256xf32>
    %28 = vector.broadcast %7 : vector<1x256xf32> to vector<8x256xf32>
    %29 = arith.addf %27, %28 : vector<8x256xf32>
    %cst_14 = arith.constant 0.000000e+00 : f32
    %30 = vector.broadcast %cst_14 : f32 to vector<8x256xf32>
    %31 = arith.maximumf %29, %30 : vector<8x256xf32>
    %c0_15 = arith.constant 0 : index
    %c0_16 = arith.constant 0 : index
    %32 = vector.load %arg6[%c0_15, %c0_16] : memref<256x128xf32, #tpu.memory_space<vmem>>, vector<256x128xf32>
    %cst_17 = arith.constant dense<0.000000e+00> : vector<8x128xf32>
    %33 = tpu.matmul %31, %32, %cst_17 {dimension_numbers = #tpu.dot_dimension_numbers<[1], [0], [0], [1], [0, 0, 1, 1], [], []>} : vector<8x256xf32>, vector<256x128xf32>, vector<8x128xf32> -> vector<8x128xf32>
    %c0_18 = arith.constant 0 : index
    %c0_19 = arith.constant 0 : index
    %34 = vector.load %arg7[%c0_18, %c0_19] : memref<1x128xf32, #tpu.memory_space<vmem>>, vector<1x128xf32>
    %35 = vector.broadcast %34 : vector<1x128xf32> to vector<8x128xf32>
    %36 = arith.addf %33, %35 : vector<8x128xf32>
    %c0_20 = arith.constant 0 : index
    %c0_21 = arith.constant 0 : index
    %37 = vector.load %arg8[%c0_20, %c0_21] : memref<1x128xf32, #tpu.memory_space<vmem>>, vector<1x128xf32>
    %c0_22 = arith.constant 0 : index
    %c0_23 = arith.constant 0 : index
    %38 = vector.load %arg9[%c0_22, %c0_23] : memref<1x128xf32, #tpu.memory_space<vmem>>, vector<1x128xf32>
    %cst_24 = arith.constant dense<0.000000e+00> : vector<8xf32>
    %39 = vector.multi_reduction <add>, %36, %cst_24 [1] : vector<8x128xf32> to vector<8xf32>
    %40 = vector.shape_cast %39 : vector<8xf32> to vector<8x1xf32>
    %cst_25 = arith.constant 1.280000e+02 : f32
    %41 = vector.broadcast %cst_25 : f32 to vector<8x1xf32>
    %42 = arith.divf %40, %41 : vector<8x1xf32>
    %43 = vector.broadcast %42 : vector<8x1xf32> to vector<8x128xf32>
    %44 = arith.subf %36, %43 : vector<8x128xf32>
    %45 = arith.mulf %44, %44 : vector<8x128xf32>
    %cst_26 = arith.constant dense<0.000000e+00> : vector<8xf32>
    %46 = vector.multi_reduction <add>, %45, %cst_26 [1] : vector<8x128xf32> to vector<8xf32>
    %47 = vector.shape_cast %46 : vector<8xf32> to vector<8x1xf32>
    %cst_27 = arith.constant 1.280000e+02 : f32
    %48 = vector.broadcast %cst_27 : f32 to vector<8x1xf32>
    %49 = arith.divf %47, %48 : vector<8x1xf32>
    %50 = vector.broadcast %42 : vector<8x1xf32> to vector<8x128xf32>
    %51 = arith.subf %36, %50 : vector<8x128xf32>
    %cst_28 = arith.constant 9.99999974E-6 : f32
    %52 = vector.broadcast %cst_28 : f32 to vector<8x1xf32>
    %53 = arith.addf %49, %52 : vector<8x1xf32>
    %54 = math.rsqrt %53 : vector<8x1xf32>
    %55 = vector.broadcast %54 : vector<8x1xf32> to vector<8x128xf32>
    %56 = arith.mulf %51, %55 : vector<8x128xf32>
    %57 = vector.broadcast %37 : vector<1x128xf32> to vector<8x128xf32>
    %58 = arith.mulf %56, %57 : vector<8x128xf32>
    %59 = vector.broadcast %38 : vector<1x128xf32> to vector<8x128xf32>
    %60 = arith.addf %58, %59 : vector<8x128xf32>
    %cst_29 = arith.constant 0.000000e+00 : f32
    %61 = vector.broadcast %cst_29 : f32 to vector<8x128xf32>
    %62 = arith.maximumf %60, %61 : vector<8x128xf32>
    %c0_30 = arith.constant 0 : index
    %c0_31 = arith.constant 0 : index
    %63 = vector.load %arg10[%c0_30, %c0_31] : memref<128x256xf32, #tpu.memory_space<vmem>>, vector<128x256xf32>
    %cst_32 = arith.constant dense<0.000000e+00> : vector<8x256xf32>
    %64 = tpu.matmul %62, %63, %cst_32 {dimension_numbers = #tpu.dot_dimension_numbers<[1], [0], [0], [1], [0, 0, 1, 1], [], []>} : vector<8x128xf32>, vector<128x256xf32>, vector<8x256xf32> -> vector<8x256xf32>
    %c0_33 = arith.constant 0 : index
    %c0_34 = arith.constant 0 : index
    %65 = vector.load %arg11[%c0_33, %c0_34] : memref<1x256xf32, #tpu.memory_space<vmem>>, vector<1x256xf32>
    %66 = vector.broadcast %65 : vector<1x256xf32> to vector<8x256xf32>
    %67 = arith.addf %64, %66 : vector<8x256xf32>
    %cst_35 = arith.constant 0.000000e+00 : f32
    %68 = vector.broadcast %cst_35 : f32 to vector<8x256xf32>
    %69 = arith.maximumf %67, %68 : vector<8x256xf32>
    %c0_36 = arith.constant 0 : index
    %c0_37 = arith.constant 0 : index
    %70 = vector.load %arg12[%c0_36, %c0_37] : memref<256x128xf32, #tpu.memory_space<vmem>>, vector<256x128xf32>
    %cst_38 = arith.constant dense<0.000000e+00> : vector<8x128xf32>
    %71 = tpu.matmul %69, %70, %cst_38 {dimension_numbers = #tpu.dot_dimension_numbers<[1], [0], [0], [1], [0, 0, 1, 1], [], []>} : vector<8x256xf32>, vector<256x128xf32>, vector<8x128xf32> -> vector<8x128xf32>
    %c0_39 = arith.constant 0 : index
    %c0_40 = arith.constant 0 : index
    %72 = vector.load %arg13[%c0_39, %c0_40] : memref<1x128xf32, #tpu.memory_space<vmem>>, vector<1x128xf32>
    %73 = vector.broadcast %72 : vector<1x128xf32> to vector<8x128xf32>
    %74 = arith.addf %71, %73 : vector<8x128xf32>
    %75 = arith.negf %74 : vector<8x128xf32>
    %76 = math.exp %75 : vector<8x128xf32>
    %cst_41 = arith.constant 1.000000e+00 : f32
    %77 = vector.broadcast %cst_41 : f32 to vector<8x128xf32>
    %78 = arith.addf %77, %76 : vector<8x128xf32>
    %79 = arith.divf %77, %78 : vector<8x128xf32>
    %c0_42 = arith.constant 0 : index
    %c0_43 = arith.constant 0 : index
    %80 = vector.load %arg14[%c0_42, %c0_43] : memref<8x128xf32, #tpu.memory_space<vmem>>, vector<8x128xf32>
    tpu.vector_store %arg14[%c0_42, %c0_43], %79 {strides = array<i32>} : memref<8x128xf32, #tpu.memory_space<vmem>>, vector<8x128xf32>,
    return
  }
  func.func @transform_0(%arg0: i32) -> (i32, i32) {
    %c0_i32 = arith.constant 0 : i32
    %c0_i32_0 = arith.constant 0 : i32
    return %arg0, %c0_i32 : i32, i32
  }
  func.func @transform_1(%arg0: i32) -> (i32, i32) {
    %c0_i32 = arith.constant 0 : i32
    %c0_i32_0 = arith.constant 0 : i32
    %c0_i32_1 = arith.constant 0 : i32
    return %c0_i32, %c0_i32_0 : i32, i32
  }
  func.func @transform_2(%arg0: i32) -> (i32, i32) {
    %c0_i32 = arith.constant 0 : i32
    %c0_i32_0 = arith.constant 0 : i32
    %c0_i32_1 = arith.constant 0 : i32
    return %c0_i32, %c0_i32_0 : i32, i32
  }
  func.func @transform_3(%arg0: i32) -> (i32, i32) {
    %c0_i32 = arith.constant 0 : i32
    %c0_i32_0 = arith.constant 0 : i32
    %c0_i32_1 = arith.constant 0 : i32
    return %c0_i32, %c0_i32_0 : i32, i32
  }
  func.func @transform_4(%arg0: i32) -> (i32, i32) {
    %c0_i32 = arith.constant 0 : i32
    %c0_i32_0 = arith.constant 0 : i32
    %c0_i32_1 = arith.constant 0 : i32
    return %c0_i32, %c0_i32_0 : i32, i32
  }
  func.func @transform_5(%arg0: i32) -> (i32, i32) {
    %c0_i32 = arith.constant 0 : i32
    %c0_i32_0 = arith.constant 0 : i32
    %c0_i32_1 = arith.constant 0 : i32
    return %c0_i32, %c0_i32_0 : i32, i32
  }
  func.func @transform_6(%arg0: i32) -> (i32, i32) {
    %c0_i32 = arith.constant 0 : i32
    %c0_i32_0 = arith.constant 0 : i32
    %c0_i32_1 = arith.constant 0 : i32
    return %c0_i32, %c0_i32_0 : i32, i32
  }
  func.func @transform_7(%arg0: i32) -> (i32, i32) {
    %c0_i32 = arith.constant 0 : i32
    %c0_i32_0 = arith.constant 0 : i32
    %c0_i32_1 = arith.constant 0 : i32
    return %c0_i32, %c0_i32_0 : i32, i32
  }
  func.func @transform_8(%arg0: i32) -> (i32, i32) {
    %c0_i32 = arith.constant 0 : i32
    %c0_i32_0 = arith.constant 0 : i32
    %c0_i32_1 = arith.constant 0 : i32
    return %c0_i32, %c0_i32_0 : i32, i32
  }
  func.func @transform_9(%arg0: i32) -> (i32, i32) {
    %c0_i32 = arith.constant 0 : i32
    %c0_i32_0 = arith.constant 0 : i32
    %c0_i32_1 = arith.constant 0 : i32
    return %c0_i32, %c0_i32_0 : i32, i32
  }
  func.func @transform_10(%arg0: i32) -> (i32, i32) {
    %c0_i32 = arith.constant 0 : i32
    %c0_i32_0 = arith.constant 0 : i32
    %c0_i32_1 = arith.constant 0 : i32
    return %c0_i32, %c0_i32_0 : i32, i32
  }
  func.func @transform_11(%arg0: i32) -> (i32, i32) {
    %c0_i32 = arith.constant 0 : i32
    %c0_i32_0 = arith.constant 0 : i32
    %c0_i32_1 = arith.constant 0 : i32
    return %c0_i32, %c0_i32_0 : i32, i32
  }
  func.func @transform_12(%arg0: i32) -> (i32, i32) {
    %c0_i32 = arith.constant 0 : i32
    %c0_i32_0 = arith.constant 0 : i32
    %c0_i32_1 = arith.constant 0 : i32
    return %c0_i32, %c0_i32_0 : i32, i32
  }
  func.func @transform_13(%arg0: i32) -> (i32, i32) {
    %c0_i32 = arith.constant 0 : i32
    %c0_i32_0 = arith.constant 0 : i32
    return %arg0, %c0_i32 : i32, i32
  }
}

</mosaic_0001>

<llo_original>
// kernel: tpu_custom_call.1
$region0: #{tpu_custom_call.1}
  #allocation0 [shape = 'u32[]', space=smem, size = 0x4, offset = 0x4, fixed_abs, tag = 'smem constant byte address 0x4 - core index']
  #allocation1 [shape = 'u32[144,128]{1,0:T(1,128)}', space=vmem, size = 0x12000, scoped, tag = 'internal scratch']
  %s0 = inlined_call_operand.hbm [shape: f32[8,128], index: 0, kind: input, shape index: {}]
  %s1 = inlined_call_operand.hbm [shape: f32[16,128], index: 1, kind: output, shape index: {}]
  %s2 = sld [smem:[#allocation0]]
  $region41: #{tpu_custom_call.1} parent=0
    _
  %s4 = ssub.s32 1, %s2
  %s5 = scalar_select 0, %s4, %s2
  $region1: #{tpu_custom_call.1} parent=0
    #allocation2 [shape = 'u8[4096]{0}', space=vmem, size = 0x1000, scoped, tag = 'input window, operand 0, single buffered']
    #allocation3 [shape = 's32[2]{0}', space=sflag, size = 0x8, scoped, tag = 'scoped memory for tpu_custom_call.1']
    #allocation4 [shape = 's32[2]{0}', space=sflag, size = 0x8, scoped, tag = 'scoped memory for tpu_custom_call.1']
    #allocation5 [shape = 'u8[8192]{0}', space=vmem, size = 0x2000, scoped, tag = 'output window, operand 0']
    %6 = vsyncpa [#allocation3], 0
    %7 = vsyncpa [#allocation4], 0
    %s8 = scalar_lea.sflag [#allocation4], 1
    %9 = vsyncpa %s8, 0
    loop: start=0, step=1, limit=4
    $region2: #{tpu_custom_call.1} parent=1 // loop_pre_header
      _
    $region3: #{tpu_custom_call.1} parent=1 // loop_header
      %s11 = sphi 0, %s15
      %p12 = scmp.ge.s32.totalorder %s11, 4
      %s19 = sphi 0, %s19
      %s21 = sphi 0, %s19
      %s22 = sphi 0, %s21
      %s36 = sphi 0, %s22
      %s42 = sphi 0, %s44
      %s45 = sphi 0, %s42
      %s46 = sphi 0, %s45
      %s62 = sphi 0, %s46
    $region4: #{tpu_custom_call.1} parent=1 // loop_header_branch
      %14 = sbr.rel (%p12) target = $region8
    $region5: #{tpu_custom_call.1} parent=1 // loop_body
      %s16 = ssub.s32 %s11, 1
      %s17 = ssub.s32 %s11, 2
      %s18 = sadd.s32 %s11, 1
      %s20 = sadd.s32 %s19, 1
      %p23 = scmp.eq.s32.totalorder %s11, 1
      %p24 = scmp.ne.s32.totalorder %s19, %s21
      %p25 = scmp.eq.s32.totalorder %s11, 0
      %p26 = por %p24, %p25
      %p27 = scmp.ne.s32.totalorder %s19, %s21
      %p28 = scmp.eq.s32.totalorder %s16, 1
      %p29 = por %p27, %p28
      %p30 = scmp.ne.s32.totalorder %s21, %s22
      %p31 = scmp.eq.s32.totalorder %s16, 0
      %p32 = por %p30, %p31
      %p33 = scmp.ne.s32.totalorder %s21, %s22
      %p34 = scmp.eq.s32.totalorder %s17, 1
      %p35 = por %p33, %p34
      %p37 = scmp.ne.s32.totalorder %s22, %s36
      %p38 = scmp.eq.s32.totalorder %s17, 0
      %p39 = por %p37, %p38
      %s40 = ssub.s32 %s11, %s18
      %p41 = scmp.eq.s32.totalorder %s40, 0
      %s43 = sadd.s32 %s42, 1
      %s44 = scalar_select %p41, %s42, %s43
      %p47 = pneg %p41
      %p48 = scmp.eq.s32.totalorder %s11, 1
      %p49 = por %p47, %p48
      %p50 = scmp.ne.s32.totalorder %s42, %s45
      %p51 = scmp.eq.s32.totalorder %s11, 0
      %p52 = por %p50, %p51
      %p53 = scmp.ne.s32.totalorder %s42, %s45
      %p54 = scmp.eq.s32.totalorder %s16, 1
      %p55 = por %p53, %p54
      %p56 = scmp.ne.s32.totalorder %s45, %s46
      %p57 = scmp.eq.s32.totalorder %s16, 0
      %p58 = por %p56, %p57
      %p59 = scmp.ne.s32.totalorder %s45, %s46
      %p60 = scmp.eq.s32.totalorder %s17, 1
      %p61 = por %p59, %p60
      %p63 = scmp.ne.s32.totalorder %s46, %s62
      %p64 = scmp.eq.s32.totalorder %s17, 0
      %p65 = por %p63, %p64
      %p66 = scmp.le.s32.totalorder 1, %s11
      %p67 = scmp.lt.s32.totalorder %s11, 3
      %p68 = pnand %p66, %p67
      %p69 = pneg %p68
      // Predicated region
      $region9: #{tpu_custom_call.1} parent=5 // pred_check
        _
      $region10: #{tpu_custom_call.1} parent=5 // pred_check_branch
        %71 = sbr.rel (%p68) target = $region12
      $region11: #{tpu_custom_call.1} parent=5 // pred_region
        %s72 = ssub.s32 %s11, 1
        // Predicated region
        $region13: #{tpu_custom_call.1} parent=11 // pred_check
          %p73 = pneg %p32
        $region14: #{tpu_custom_call.1} parent=11 // pred_check_branch
          %75 = sbr.rel (%p73) target = $region16
        $region15: #{tpu_custom_call.1} parent=11 // pred_region
          %s77 = ssub.s32 128, 128
          %78 = vsyncadd [#allocation3], %s77
          %s80 = sshll.u32 [#allocation2], 4
          %s81 = int_to_ptr.vmem [resolvable:$true] %s80
          %83 = dma.hbm_to_vmem [thread:$0]  %s0, 128, %s81, [#allocation3]
        $region16: #{tpu_custom_call.1} parent=11 // pred_fallthru
          _
      $region12: #{tpu_custom_call.1} parent=5 // pred_fallthru
        _
      %p84 = scmp.lt.s32.totalorder %s11, 2
      // Predicated region
      $region17: #{tpu_custom_call.1} parent=5 // pred_check
        %p85 = pneg %p84
      $region18: #{tpu_custom_call.1} parent=5 // pred_check_branch
        %87 = sbr.rel (%p85) target = $region20
      $region19: #{tpu_custom_call.1} parent=5 // pred_region
        _
      $region20: #{tpu_custom_call.1} parent=5 // pred_fallthru
        _
      %p88 = scmp.le.s32.totalorder 1, %s11
      %p89 = scmp.lt.s32.totalorder %s11, 3
      %p90 = pnand %p88, %p89
      %p91 = pneg %p90
      // Predicated region
      $region21: #{tpu_custom_call.1} parent=5 // pred_check
        _
      $region22: #{tpu_custom_call.1} parent=5 // pred_check_branch
        %93 = sbr.rel (%p90) target = $region24
      $region23: #{tpu_custom_call.1} parent=5 // pred_region
        %s94 = ssub.s32 %s11, 1
        // Predicated region
        $region25: #{tpu_custom_call.1} parent=23 // pred_check
          %p95 = pneg %p32
        $region26: #{tpu_custom_call.1} parent=23 // pred_check_branch
          %97 = sbr.rel (%p95) target = $region28
        $region27: #{tpu_custom_call.1} parent=23 // pred_region
          %98 = dma.done [#allocation3], 128
        $region28: #{tpu_custom_call.1} parent=23 // pred_fallthru
          _
        %p99 = pneg %p32
        %p100 = pneg %p29
        %p101 = pneg %p58
        %p102 = pneg %p55
        %s103 = sand.u32 %s45, 1
        %s104 = scalar_lea.sflag [#allocation4], %s103
        %s105 = sand.u32 %s45, 1
        %s106 = smul.addr %s105, 8
        %s107 = scalar_lea.vmem [#allocation5], %s106
        %v108 = vld [vmem:[#allocation2] sm:$0xff]
        %109 = vst [vmem:[%s107] sm:$0xff] %v108
        %s110 = sand.u32 %s45, 1
        %s111 = scalar_lea.sflag [#allocation4], %s110
        %s112 = sand.u32 %s45, 1
        %s113 = smul.addr %s112, 8
        %s114 = scalar_lea.vmem [#allocation5], %s113
        // Predicated region
        $region29: #{tpu_custom_call.1} parent=23 // pred_check
          %p115 = pneg %p55
        $region30: #{tpu_custom_call.1} parent=23 // pred_check_branch
          %117 = sbr.rel (%p115) target = $region32
        $region31: #{tpu_custom_call.1} parent=23 // pred_region
          %s119 = ssub.s32 128, 128
          %120 = vsyncadd %s111, %s119
          %s121 = smul.addr %s16, 128
          %s122 = scalar_lea.hbm %s1, %s121
          %s124 = sshll.u32 %s114, 4
          %s125 = int_to_ptr.vmem [resolvable:$true] %s124
          %127 = dma.vmem_to_hbm [thread:$0]  %s125, 128, %s122, %s111
        $region32: #{tpu_custom_call.1} parent=23 // pred_fallthru
          _
      $region24: #{tpu_custom_call.1} parent=5 // pred_fallthru
        _
      %p128 = scmp.le.s32.totalorder 2, %s11
      // Predicated region
      $region33: #{tpu_custom_call.1} parent=5 // pred_check
        %p129 = pneg %p128
      $region34: #{tpu_custom_call.1} parent=5 // pred_check_branch
        %131 = sbr.rel (%p129) target = $region36
      $region35: #{tpu_custom_call.1} parent=5 // pred_region
        %s132 = ssub.s32 %s11, 2
        // Predicated region
        $region37: #{tpu_custom_call.1} parent=35 // pred_check
          %p133 = pneg %p61
        $region38: #{tpu_custom_call.1} parent=35 // pred_check_branch
          %135 = sbr.rel (%p133) target = $region40
        $region39: #{tpu_custom_call.1} parent=35 // pred_region
          %s136 = sand.u32 %s46, 1
          %s137 = scalar_lea.sflag [#allocation4], %s136
          %s138 = sand.u32 %s46, 1
          %s139 = smul.addr %s138, 8
          %s140 = scalar_lea.vmem [#allocation5], %s139
          %141 = dma.done %s137, 128
        $region40: #{tpu_custom_call.1} parent=35 // pred_fallthru
          _
      $region36: #{tpu_custom_call.1} parent=5 // pred_fallthru
        _
    $region6: #{tpu_custom_call.1} parent=1 // loop_footer
      %s15 = sadd.s32 1, %s11
    $region7: #{tpu_custom_call.1} parent=1 // loop_footer_branch
      %10 = sbr.rel target = $region3
    $region8: #{tpu_custom_call.1} parent=1 // loop_exit
      _
    %142 = vsyncpa [#allocation3], 1
    %s143 = scalar_lea.sflag [#allocation3], 1
    %144 = vsyncpa %s143, 1
    %145 = vsyncpa [#allocation4], 1
    %s146 = scalar_lea.sflag [#allocation4], 1
    %147 = vsyncpa %s146, 1

// kernel: run_fused.1
$region0: #{run_fused.1}
  #allocation0 [shape = 'u32[]', space=smem, size = 0x4, offset = 0x4, fixed_abs, tag = 'smem constant byte address 0x4 - core index']
  #allocation1 [shape = 'u32[144,128]{1,0:T(1,128)}', space=vmem, size = 0x12000, scoped, tag = 'internal scratch']
  %s0 = inlined_call_operand.hbm [shape: f32[8,16], index: 0, kind: input, shape index: {}]
  %s1 = inlined_call_operand.hbm [shape: f32[16,256], index: 1, kind: input, shape index: {}]
  %s2 = inlined_call_operand.vmem [shape: f32[1,256], index: 2, kind: input, shape index: {}]
  %s3 = inlined_call_operand.vmem [shape: f32[1,256], index: 3, kind: input, shape index: {}]
  %s4 = inlined_call_operand.vmem [shape: f32[1,256], index: 4, kind: input, shape index: {}]
  %s5 = inlined_call_operand.hbm [shape: f32[256,128], index: 5, kind: input, shape index: {}]
  %s6 = inlined_call_operand.vmem [shape: f32[1,128], index: 6, kind: input, shape index: {}]
  %s7 = inlined_call_operand.vmem [shape: f32[1,128], index: 7, kind: input, shape index: {}]
  %s8 = inlined_call_operand.vmem [shape: f32[1,128], index: 8, kind: input, shape index: {}]
  %s9 = inlined_call_operand.hbm [shape: f32[128,256], index: 9, kind: input, shape index: {}]
  %s10 = inlined_call_operand.vmem [shape: f32[1,256], index: 10, kind: input, shape index: {}]
  %s11 = inlined_call_operand.hbm [shape: f32[256,128], index: 11, kind: input, shape index: {}]
  %s12 = inlined_call_operand.vmem [shape: f32[1,128], index: 12, kind: input, shape index: {}]
  %s13 = inlined_call_operand.hbm [shape: f32[8,128], index: 13, kind: output, shape index: {}]
  %s14 = sld [smem:[#allocation0]]
  $region82: #{run_fused.1} parent=0
    _
  %s16 = ssub.s32 1, %s14
  %s17 = scalar_select 0, %s16, %s14
  $region1: #{run_fused.1} parent=0
    #allocation2 [shape = 'u8[4096]{0}', space=vmem, size = 0x1000, scoped, tag = 'input window, operand 0, single buffered']
    #allocation3 [shape = 's32[1]{0}', space=sflag, size = 0x4, scoped, tag = 'scoped memory for run_fused.1']
    #allocation4 [shape = 's32[1]{0}', space=sflag, size = 0x4, scoped, tag = 'scoped memory for run_fused.1']
    #allocation5 [shape = 'u8[16384]{0}', space=vmem, size = 0x4000, scoped, tag = 'input window, operand 1, single buffered']
    #allocation6 [shape = 's32[1]{0}', space=sflag, size = 0x4, scoped, tag = 'scoped memory for run_fused.1']
    #allocation7 [shape = 'u8[131072]{0}', space=vmem, size = 0x20000, scoped, tag = 'input window, operand 5, single buffered']
    #allocation8 [shape = 'u8[131072]{0}', space=vmem, size = 0x20000, scoped, tag = 'input window, operand 9, single buffered']
    #allocation9 [shape = 's32[1]{0}', space=sflag, size = 0x4, scoped, tag = 'scoped memory for run_fused.1']
    #allocation10 [shape = 'u8[131072]{0}', space=vmem, size = 0x20000, scoped, tag = 'input window, operand 11, single buffered']
    #allocation11 [shape = 'u8[4096]{0}', space=vmem, size = 0x1000, scoped, tag = 'output window, operand 0, single buffered']
    %18 = vsyncpa [#allocation3], 0
    %19 = vsyncpa [#allocation6], 0
    %20 = vsyncpa [#allocation9], 0
    %21 = vsyncpa [#allocation4], 0
    // Predicated region
    $region2: #{run_fused.1} parent=1 // pred_check
      _
    $region3: #{run_fused.1} parent=1 // pred_check_branch
      %23 = sbr.rel (0) target = $region5
    $region4: #{run_fused.1} parent=1 // pred_region
      %s25 = ssub.s32 128, 128
      %26 = vsyncadd [#allocation3], %s25
      %s28 = sshll.u32 [#allocation2], 4
      %s29 = int_to_ptr.vmem [resolvable:$true] %s28
      %31 = dma.hbm_to_vmem [thread:$0]  %s0, 128, %s29, [#allocation3]
    $region5: #{run_fused.1} parent=1 // pred_fallthru
      _
    // Predicated region
    $region6: #{run_fused.1} parent=1 // pred_check
      _
    $region7: #{run_fused.1} parent=1 // pred_check_branch
      %33 = sbr.rel (0) target = $region9
    $region8: #{run_fused.1} parent=1 // pred_region
      %s35 = ssub.s32 512, 512
      %36 = vsyncadd [#allocation6], %s35
      %s37 = sshll.u32 [#allocation5], 4
      %s38 = int_to_ptr.vmem [resolvable:$true] %s37
      %43 = dma.hbm_to_vmem [thread:$0]  %s1, 512, %s38, [#allocation6], 256, 256, 16
    $region9: #{run_fused.1} parent=1 // pred_fallthru
      _
    // Predicated region
    $region10: #{run_fused.1} parent=1 // pred_check
      _
    $region11: #{run_fused.1} parent=1 // pred_check_branch
      %45 = sbr.rel (0) target = $region13
    $region12: #{run_fused.1} parent=1 // pred_region
      _
    $region13: #{run_fused.1} parent=1 // pred_fallthru
      _
    // Predicated region
    $region14: #{run_fused.1} parent=1 // pred_check
      _
    $region15: #{run_fused.1} parent=1 // pred_check_branch
      %47 = sbr.rel (0) target = $region17
    $region16: #{run_fused.1} parent=1 // pred_region
      _
    $region17: #{run_fused.1} parent=1 // pred_fallthru
      _
    // Predicated region
    $region18: #{run_fused.1} parent=1 // pred_check
      _
    $region19: #{run_fused.1} parent=1 // pred_check_branch
      %49 = sbr.rel (0) target = $region21
    $region20: #{run_fused.1} parent=1 // pred_region
      _
    $region21: #{run_fused.1} parent=1 // pred_fallthru
      _
    // Predicated region
    $region22: #{run_fused.1} parent=1 // pred_check
      _
    $region23: #{run_fused.1} parent=1 // pred_check_branch
      %51 = sbr.rel (0) target = $region25
    $region24: #{run_fused.1} parent=1 // pred_region
      %s53 = ssub.s32 4096, 4096
      %54 = vsyncadd [#allocation6], %s53
      %s55 = sshll.u32 [#allocation7], 4
      %s56 = int_to_ptr.vmem [resolvable:$true] %s55
      %61 = dma.hbm_to_vmem [thread:$0]  %s5, 4096, %s56, [#allocation6], 128, 128, 8
    $region25: #{run_fused.1} parent=1 // pred_fallthru
      _
    // Predicated region
    $region26: #{run_fused.1} parent=1 // pred_check
      _
    $region27: #{run_fused.1} parent=1 // pred_check_branch
      %63 = sbr.rel (0) target = $region29
    $region28: #{run_fused.1} parent=1 // pred_region
      _
    $region29: #{run_fused.1} parent=1 // pred_fallthru
      _
    // Predicated region
    $region30: #{run_fused.1} parent=1 // pred_check
      _
    $region31: #{run_fused.1} parent=1 // pred_check_branch
      %65 = sbr.rel (0) target = $region33
    $region32: #{run_fused.1} parent=1 // pred_region
      _
    $region33: #{run_fused.1} parent=1 // pred_fallthru
      _
    // Predicated region
    $region34: #{run_fused.1} parent=1 // pred_check
      _
    $region35: #{run_fused.1} parent=1 // pred_check_branch
      %67 = sbr.rel (0) target = $region37
    $region36: #{run_fused.1} parent=1 // pred_region
      _
    $region37: #{run_fused.1} parent=1 // pred_fallthru
      _
    // Predicated region
    $region38: #{run_fused.1} parent=1 // pred_check
      _
    $region39: #{run_fused.1} parent=1 // pred_check_branch
      %69 = sbr.rel (0) target = $region41
    $region40: #{run_fused.1} parent=1 // pred_region
      %s71 = ssub.s32 4096, 4096
      %72 = vsyncadd [#allocation9], %s71
      %s73 = sshll.u32 [#allocation8], 4
      %s74 = int_to_ptr.vmem [resolvable:$true] %s73
      %79 = dma.hbm_to_vmem [thread:$0]  %s9, 4096, %s74, [#allocation9], 256, 256, 16
    $region41: #{run_fused.1} parent=1 // pred_fallthru
      _
    // Predicated region
    $region42: #{run_fused.1} parent=1 // pred_check
      _
    $region43: #{run_fused.1} parent=1 // pred_check_branch
      %81 = sbr.rel (0) target = $region45
    $region44: #{run_fused.1} parent=1 // pred_region
      _
    $region45: #{run_fused.1} parent=1 // pred_fallthru
      _
    // Predicated region
    $region46: #{run_fused.1} parent=1 // pred_check
      _
    $region47: #{run_fused.1} parent=1 // pred_check_branch
      %83 = sbr.rel (0) target = $region49
    $region48: #{run_fused.1} parent=1 // pred_region
      %s85 = ssub.s32 4096, 4096
      %86 = vsyncadd [#allocation9], %s85
      %s87 = sshll.u32 [#allocation10], 4
      %s88 = int_to_ptr.vmem [resolvable:$true] %s87
      %93 = dma.hbm_to_vmem [thread:$0]  %s11, 4096, %s88, [#allocation9], 128, 128, 8
    $region49: #{run_fused.1} parent=1 // pred_fallthru
      _
    // Predicated region
    $region50: #{run_fused.1} parent=1 // pred_check
      _
    $region51: #{run_fused.1} parent=1 // pred_check_branch
      %95 = sbr.rel (0) target = $region53
    $region52: #{run_fused.1} parent=1 // pred_region
      _
    $region53: #{run_fused.1} parent=1 // pred_fallthru
      _
    // Predicated region
    $region54: #{run_fused.1} parent=1 // pred_check
      _
    $region55: #{run_fused.1} parent=1 // pred_check_branch
      %97 = sbr.rel (0) target = $region57
    $region56: #{run_fused.1} parent=1 // pred_region
      %98 = dma.done [#allocation3], 128
    $region57: #{run_fused.1} parent=1 // pred_fallthru
      _
    // Predicated region
    $region58: #{run_fused.1} parent=1 // pred_check
      _
    $region59: #{run_fused.1} parent=1 // pred_check_branch
      %100 = sbr.rel (0) target = $region61
    $region60: #{run_fused.1} parent=1 // pred_region
      %101 = dma.done [#allocation6], 512
    $region61: #{run_fused.1} parent=1 // pred_fallthru
      _
    // Predicated region
    $region62: #{run_fused.1} parent=1 // pred_check
      _
    $region63: #{run_fused.1} parent=1 // pred_check_branch
      %103 = sbr.rel (0) target = $region65
    $region64: #{run_fused.1} parent=1 // pred_region
      %104 = dma.done [#allocation6], 4096
    $region65: #{run_fused.1} parent=1 // pred_fallthru
      _
    // Predicated region
    $region66: #{run_fused.1} parent=1 // pred_check
      _
    $region67: #{run_fused.1} parent=1 // pred_check_branch
      %106 = sbr.rel (0) target = $region69
    $region68: #{run_fused.1} parent=1 // pred_region
      %107 = dma.done [#allocation9], 4096
    $region69: #{run_fused.1} parent=1 // pred_fallthru
      _
    // Predicated region
    $region70: #{run_fused.1} parent=1 // pred_check
      _
    $region71: #{run_fused.1} parent=1 // pred_check_branch
      %109 = sbr.rel (0) target = $region73
    $region72: #{run_fused.1} parent=1 // pred_region
      %110 = dma.done [#allocation9], 4096
    $region73: #{run_fused.1} parent=1 // pred_fallthru
      _
    %v111 = vld [vmem:[#allocation2] sm:$0xff]
    %v112 = vld [vmem:[#allocation5] sm:$0xff]
    %v113 = vld [vmem:[#allocation5 + $0x8] sm:$0xff]
    %v114 = vld [vmem:[#allocation5 + $0x10] sm:$0xff]
    %v115 = vld [vmem:[#allocation5 + $0x18] sm:$0xff]
    %v116 = vld [vmem:[%s2] sm:$0x3]
    %v118 = vlaneseq
    %v119 = vshrl.u32 %v118, 7
    %v120 = vsub.s32 0, %v119
    %v121 = vrot.slane %v116, %v120
    %v122 = vlaneseq
    %v123 = vshrl.u32 %v122, 7
    %v124 = vsub.s32 1, %v123
    %v125 = vrot.slane %v116, %v124
    %vm128 = vcmask 130048
    %v130 = vsel %vm128, %v111, 0
    %132 = vmatprep.subr.mxu0 %v113
    %133 = vmatpush1.msra.mxu0 %v112
    %134 = vmatprep.subr.mxu0 %v115
    %135 = vmatpush1.msra.mxu0 %v114
    %136 = vmatprep.subr.mxu0 0.0
    %137 = vmatpush1.msra.mxu0 0.0
    %138 = vmatprep.subr.mxu0 0.0
    %139 = vmatpush1.msra.mxu0 0.0
    %140 = vmatprep.subr.mxu0 0.0
    %141 = vmatpush1.msra.mxu0 0.0
    %142 = vmatprep.subr.mxu0 0.0
    %143 = vmatpush1.msra.mxu0 0.0
    %144 = vmatprep.subr.mxu0 0.0
    %145 = vmatpush1.msra.mxu0 0.0
    %146 = vmatprep.subr.mxu0 0.0
    %147 = vmatpush1.msra.mxu0 0.0
    %148 = vmatprep.subr.mxu0 0.0
    %149 = vmatpush1.msra.mxu0 0.0
    %150 = vmatprep.subr.mxu0 0.0
    %151 = vmatpush1.msra.mxu0 0.0
    %152 = vmatprep.subr.mxu0 0.0
    %153 = vmatpush1.msra.mxu0 0.0
    %154 = vmatprep.subr.mxu0 0.0
    %155 = vmatpush1.msra.mxu0 0.0
    %156 = vmatprep.subr.mxu0 0.0
    %157 = vmatpush1.msra.mxu0 0.0
    %158 = vmatprep.subr.mxu0 0.0
    %159 = vmatpush1.msra.mxu0 0.0
    %160 = vmatprep.subr.mxu0 0.0
    %161 = vmatpush1.msra.mxu0 0.0
    %162 = vmatprep.subr.mxu0 0.0
    %163 = vmatpush1.msra.mxu0 0.0
    %164 = vmatprep.subr.mxu0 0.0
    %165 = vmatpush1.msra.mxu0 0.0
    %166 = vmatprep.subr.mxu0 0.0
    %167 = vmatpush1.msra.mxu0 0.0
    %168 = vmatprep.subr.mxu0 0.0
    %169 = vmatpush1.msra.mxu0 0.0
    %170 = vmatprep.subr.mxu0 0.0
    %171 = vmatpush1.msra.mxu0 0.0
    %172 = vmatprep.subr.mxu0 0.0
    %173 = vmatpush1.msra.mxu0 0.0
    %174 = vmatprep.subr.mxu0 0.0
    %175 = vmatpush1.msra.mxu0 0.0
    %176 = vmatprep.subr.mxu0 0.0
    %177 = vmatpush1.msra.mxu0 0.0
    %178 = vmatprep.subr.mxu0 0.0
    %179 = vmatpush1.msra.mxu0 0.0
    %180 = vmatprep.subr.mxu0 0.0
    %181 = vmatpush1.msra.mxu0 0.0
    %182 = vmatprep.subr.mxu0 0.0
    %183 = vmatpush1.msra.mxu0 0.0
    %184 = vmatprep.subr.mxu0 0.0
    %185 = vmatpush1.msra.mxu0 0.0
    %186 = vmatprep.subr.mxu0 0.0
    %187 = vmatpush1.msra.mxu0 0.0
    %188 = vmatprep.subr.mxu0 0.0
    %189 = vmatpush1.msra.mxu0 0.0
    %190 = vmatprep.subr.mxu0 0.0
    %191 = vmatpush1.msra.mxu0 0.0
    %192 = vmatprep.subr.mxu0 0.0
    %193 = vmatpush1.msra.mxu0 0.0
    %194 = vmatprep.subr.mxu0 0.0
    %195 = vmatpush1.msra.mxu0 0.0
    %196 = vmatprep.mubr.f32.mxu0 0.0
    %197 = vmatmul.mubr.f32.gmra.mrb[0].mxu0 %v130
    %v198 = vpop.f32.mrb[0].mxu0
    %v199 = vadd.f32 %v121, %v198
    %v200 = vpop.f32.mrb[0].mxu0
    %v201 = vadd.f32 %v125, %v200
    %202 = vdwg.mxu0
    %v203 = vld [vmem:[%s3] sm:$0x3]
    %v204 = vld [vmem:[%s4] sm:$0x3]
    %v205 = vadd.f32 %v199, %v201
    %206 = vadd.xlane.f32.xlu0 %v205
    %v207 = vpop.xlane.xlu0 %206
    %v208 = vrcp.pop 256.0
    %v209 = vmul.f32 %v207, %v208
    %v210 = vsub.f32 %v199, %v209
    %v211 = vsub.f32 %v201, %v209
    %v212 = vmul.f32 %v210, %v210
    %v213 = vmul.f32 %v211, %v211
    %v214 = vadd.f32 %v212, %v213
    %215 = vadd.xlane.f32.xlu0 %v214
    %v216 = vpop.xlane.xlu0 %215
    %v217 = vmul.f32 %v216, %v208
    %v218 = vadd.f32 %v217, 1e-05
    %v219 = vrsqrt.pop %v218
    %v220 = vmul.f32 %v210, %v219
    %v221 = vmul.f32 %v211, %v219
    %v223 = vlaneseq
    %v224 = vshrl.u32 %v223, 7
    %v225 = vsub.s32 0, %v224
    %v226 = vrot.slane %v203, %v225
    %v227 = vlaneseq
    %v228 = vshrl.u32 %v227, 7
    %v229 = vsub.s32 1, %v228
    %v230 = vrot.slane %v203, %v229
    %v233 = vmul.f32 %v220, %v226
    %v234 = vmul.f32 %v221, %v230
    %v236 = vlaneseq
    %v237 = vshrl.u32 %v236, 7
    %v238 = vsub.s32 0, %v237
    %v239 = vrot.slane %v204, %v238
    %v240 = vlaneseq
    %v241 = vshrl.u32 %v240, 7
    %v242 = vsub.s32 1, %v241
    %v243 = vrot.slane %v204, %v242
    %v246 = vadd.f32 %v233, %v239
    %v247 = vadd.f32 %v234, %v243
    %v248 = vmax.f32 %v246, 0.0
    %v249 = vmax.f32 %v247, 0.0
    %v250 = vld [vmem:[#allocation7] sm:$0xff]
    %v251 = vld [vmem:[#allocation7 + $0x8] sm:$0xff]
    %v252 = vld [vmem:[#allocation7 + $0x10] sm:$0xff]
    %v253 = vld [vmem:[#allocation7 + $0x18] sm:$0xff]
    %v254 = vld [vmem:[#allocation7 + $0x20] sm:$0xff]
    %v255 = vld [vmem:[#allocation7 + $0x28] sm:$0xff]
    %v256 = vld [vmem:[#allocation7 + $0x30] sm:$0xff]
    %v257 = vld [vmem:[#allocation7 + $0x38] sm:$0xff]
    %v258 = vld [vmem:[#allocation7 + $0x40] sm:$0xff]
    %v259 = vld [vmem:[#allocation7 + $0x48] sm:$0xff]
    %v260 = vld [vmem:[#allocation7 + $0x50] sm:$0xff]
    %v261 = vld [vmem:[#allocation7 + $0x58] sm:$0xff]
    %v262 = vld [vmem:[#allocation7 + $0x60] sm:$0xff]
    %v263 = vld [vmem:[#allocation7 + $0x68] sm:$0xff]
    %v264 = vld [vmem:[#allocation7 + $0x70] sm:$0xff]
    %v265 = vld [vmem:[#allocation7 + $0x78] sm:$0xff]
    %v266 = vld [vmem:[#allocation7 + $0x80] sm:$0xff]
    %v267 = vld [vmem:[#allocation7 + $0x88] sm:$0xff]
    %v268 = vld [vmem:[#allocation7 + $0x90] sm:$0xff]
    %v269 = vld [vmem:[#allocation7 + $0x98] sm:$0xff]
    %v270 = vld [vmem:[#allocation7 + $0xa0] sm:$0xff]
    %v271 = vld [vmem:[#allocation7 + $0xa8] sm:$0xff]
    %v272 = vld [vmem:[#allocation7 + $0xb0] sm:$0xff]
    %v273 = vld [vmem:[#allocation7 + $0xb8] sm:$0xff]
    %v274 = vld [vmem:[#allocation7 + $0xc0] sm:$0xff]
    %v275 = vld [vmem:[#allocation7 + $0xc8] sm:$0xff]
    %v276 = vld [vmem:[#allocation7 + $0xd0] sm:$0xff]
    %v277 = vld [vmem:[#allocation7 + $0xd8] sm:$0xff]
    %v278 = vld [vmem:[#allocation7 + $0xe0] sm:$0xff]
    %v279 = vld [vmem:[#allocation7 + $0xe8] sm:$0xff]
    %v280 = vld [vmem:[#allocation7 + $0xf0] sm:$0xff]
    %v281 = vld [vmem:[#allocation7 + $0xf8] sm:$0xff]
    %v282 = vld [vmem:[%s6] sm:$0x1]
    %v284 = vlaneseq
    %v285 = vshrl.u32 %v284, 7
    %v286 = vsub.s32 0, %v285
    %v287 = vrot.slane %v282, %v286
    %289 = vmatprep.subr.mxu0 0.0
    %290 = vmatpush1.msra.mxu0 %v250
    %291 = vmatprep.subr.mxu0 0.0
    %292 = vmatpush1.msra.mxu0 %v251
    %293 = vmatprep.subr.mxu0 0.0
    %294 = vmatpush1.msra.mxu0 %v252
    %295 = vmatprep.subr.mxu0 0.0
    %296 = vmatpush1.msra.mxu0 %v253
    %297 = vmatprep.subr.mxu0 0.0
    %298 = vmatpush1.msra.mxu0 %v254
    %299 = vmatprep.subr.mxu0 0.0
    %300 = vmatpush1.msra.mxu0 %v255
    %301 = vmatprep.subr.mxu0 0.0
    %302 = vmatpush1.msra.mxu0 %v256
    %303 = vmatprep.subr.mxu0 0.0
    %304 = vmatpush1.msra.mxu0 %v257
    %305 = vmatprep.subr.mxu0 0.0
    %306 = vmatpush1.msra.mxu0 %v258
    %307 = vmatprep.subr.mxu0 0.0
    %308 = vmatpush1.msra.mxu0 %v259
    %309 = vmatprep.subr.mxu0 0.0
    %310 = vmatpush1.msra.mxu0 %v260
    %311 = vmatprep.subr.mxu0 0.0
    %312 = vmatpush1.msra.mxu0 %v261
    %313 = vmatprep.subr.mxu0 0.0
    %314 = vmatpush1.msra.mxu0 %v262
    %315 = vmatprep.subr.mxu0 0.0
    %316 = vmatpush1.msra.mxu0 %v263
    %317 = vmatprep.subr.mxu0 0.0
    %318 = vmatpush1.msra.mxu0 %v264
    %319 = vmatprep.subr.mxu0 0.0
    %320 = vmatpush1.msra.mxu0 %v265
    %321 = vmatprep.subr.mxu0 0.0
    %322 = vmatpush1.msra.mxu0 %v266
    %323 = vmatprep.subr.mxu0 0.0
    %324 = vmatpush1.msra.mxu0 %v267
    %325 = vmatprep.subr.mxu0 0.0
    %326 = vmatpush1.msra.mxu0 %v268
    %327 = vmatprep.subr.mxu0 0.0
    %328 = vmatpush1.msra.mxu0 %v269
    %329 = vmatprep.subr.mxu0 0.0
    %330 = vmatpush1.msra.mxu0 %v270
    %331 = vmatprep.subr.mxu0 0.0
    %332 = vmatpush1.msra.mxu0 %v271
    %333 = vmatprep.subr.mxu0 0.0
    %334 = vmatpush1.msra.mxu0 %v272
    %335 = vmatprep.subr.mxu0 0.0
    %336 = vmatpush1.msra.mxu0 %v273
    %337 = vmatprep.subr.mxu0 0.0
    %338 = vmatpush1.msra.mxu0 %v274
    %339 = vmatprep.subr.mxu0 0.0
    %340 = vmatpush1.msra.mxu0 %v275
    %341 = vmatprep.subr.mxu0 0.0
    %342 = vmatpush1.msra.mxu0 %v276
    %343 = vmatprep.subr.mxu0 0.0
    %344 = vmatpush1.msra.mxu0 %v277
    %345 = vmatprep.subr.mxu0 0.0
    %346 = vmatpush1.msra.mxu0 %v278
    %347 = vmatprep.subr.mxu0 0.0
    %348 = vmatpush1.msra.mxu0 %v279
    %349 = vmatprep.subr.mxu0 0.0
    %350 = vmatpush1.msra.mxu0 %v280
    %351 = vmatprep.subr.mxu0 0.0
    %352 = vmatpush1.msra.mxu0 %v281
    %353 = vmatprep.mubr.f32.mxu0 %v249
    %354 = vmatmul.mubr.f32.gmra.mrb[0].mxu0 %v248
    %v355 = vpop.f32.mrb[0].mxu0
    %v356 = vadd.f32 %v287, %v355
    %v357 = vpop.f32.mrb[0].mxu0
    %358 = vdwg.mxu0
    %v359 = vld [vmem:[%s7] sm:$0x1]
    %v360 = vld [vmem:[%s8] sm:$0x1]
    %361 = vadd.xlane.f32.xlu0 %v356
    %v362 = vpop.xlane.xlu0 %361
    %v363 = vrcp.pop 128.0
    %v364 = vmul.f32 %v362, %v363
    %v365 = vsub.f32 %v356, %v364
    %v366 = vmul.f32 %v365, %v365
    %367 = vadd.xlane.f32.xlu0 %v366
    %v368 = vpop.xlane.xlu0 %367
    %v369 = vmul.f32 %v368, %v363
    %v370 = vadd.f32 %v369, 1e-05
    %v371 = vrsqrt.pop %v370
    %v372 = vmul.f32 %v365, %v371
    %v374 = vlaneseq
    %v375 = vshrl.u32 %v374, 7
    %v376 = vsub.s32 0, %v375
    %v377 = vrot.slane %v359, %v376
    %v379 = vmul.f32 %v372, %v377
    %v381 = vlaneseq
    %v382 = vshrl.u32 %v381, 7
    %v383 = vsub.s32 0, %v382
    %v384 = vrot.slane %v360, %v383
    %v386 = vadd.f32 %v379, %v384
    %v387 = vmax.f32 %v386, 0.0
    %v388 = vld [vmem:[#allocation8] sm:$0xff]
    %v389 = vld [vmem:[#allocation8 + $0x8] sm:$0xff]
    %v390 = vld [vmem:[#allocation8 + $0x10] sm:$0xff]
    %v391 = vld [vmem:[#allocation8 + $0x18] sm:$0xff]
    %v392 = vld [vmem:[#allocation8 + $0x20] sm:$0xff]
    %v393 = vld [vmem:[#allocation8 + $0x28] sm:$0xff]
    %v394 = vld [vmem:[#allocation8 + $0x30] sm:$0xff]
    %v395 = vld [vmem:[#allocation8 + $0x38] sm:$0xff]
    %v396 = vld [vmem:[#allocation8 + $0x40] sm:$0xff]
    %v397 = vld [vmem:[#allocation8 + $0x48] sm:$0xff]
    %v398 = vld [vmem:[#allocation8 + $0x50] sm:$0xff]
    %v399 = vld [vmem:[#allocation8 + $0x58] sm:$0xff]
    %v400 = vld [vmem:[#allocation8 + $0x60] sm:$0xff]
    %v401 = vld [vmem:[#allocation8 + $0x68] sm:$0xff]
    %v402 = vld [vmem:[#allocation8 + $0x70] sm:$0xff]
    %v403 = vld [vmem:[#allocation8 + $0x78] sm:$0xff]
    %v404 = vld [vmem:[#allocation8 + $0x80] sm:$0xff]
    %v405 = vld [vmem:[#allocation8 + $0x88] sm:$0xff]
    %v406 = vld [vmem:[#allocation8 + $0x90] sm:$0xff]
    %v407 = vld [vmem:[#allocation8 + $0x98] sm:$0xff]
    %v408 = vld [vmem:[#allocation8 + $0xa0] sm:$0xff]
    %v409 = vld [vmem:[#allocation8 + $0xa8] sm:$0xff]
    %v410 = vld [vmem:[#allocation8 + $0xb0] sm:$0xff]
    %v411 = vld [vmem:[#allocation8 + $0xb8] sm:$0xff]
    %v412 = vld [vmem:[#allocation8 + $0xc0] sm:$0xff]
    %v413 = vld [vmem:[#allocation8 + $0xc8] sm:$0xff]
    %v414 = vld [vmem:[#allocation8 + $0xd0] sm:$0xff]
    %v415 = vld [vmem:[#allocation8 + $0xd8] sm:$0xff]
    %v416 = vld [vmem:[#allocation8 + $0xe0] sm:$0xff]
    %v417 = vld [vmem:[#allocation8 + $0xe8] sm:$0xff]
    %v418 = vld [vmem:[#allocation8 + $0xf0] sm:$0xff]
    %v419 = vld [vmem:[#allocation8 + $0xf8] sm:$0xff]
    %v420 = vld [vmem:[%s10] sm:$0x3]
    %v422 = vlaneseq
    %v423 = vshrl.u32 %v422, 7
    %v424 = vsub.s32 0, %v423
    %v425 = vrot.slane %v420, %v424
    %v426 = vlaneseq
    %v427 = vshrl.u32 %v426, 7
    %v428 = vsub.s32 1, %v427
    %v429 = vrot.slane %v420, %v428
    %432 = vmatprep.subr.mxu0 %v389
    %433 = vmatpush1.msra.mxu0 %v388
    %434 = vmatprep.subr.mxu0 %v391
    %435 = vmatpush1.msra.mxu0 %v390
    %436 = vmatprep.subr.mxu0 %v393
    %437 = vmatpush1.msra.mxu0 %v392
    %438 = vmatprep.subr.mxu0 %v395
    %439 = vmatpush1.msra.mxu0 %v394
    %440 = vmatprep.subr.mxu0 %v397
    %441 = vmatpush1.msra.mxu0 %v396
    %442 = vmatprep.subr.mxu0 %v399
    %443 = vmatpush1.msra.mxu0 %v398
    %444 = vmatprep.subr.mxu0 %v401
    %445 = vmatpush1.msra.mxu0 %v400
    %446 = vmatprep.subr.mxu0 %v403
    %447 = vmatpush1.msra.mxu0 %v402
    %448 = vmatprep.subr.mxu0 %v405
    %449 = vmatpush1.msra.mxu0 %v404
    %450 = vmatprep.subr.mxu0 %v407
    %451 = vmatpush1.msra.mxu0 %v406
    %452 = vmatprep.subr.mxu0 %v409
    %453 = vmatpush1.msra.mxu0 %v408
    %454 = vmatprep.subr.mxu0 %v411
    %455 = vmatpush1.msra.mxu0 %v410
    %456 = vmatprep.subr.mxu0 %v413
    %457 = vmatpush1.msra.mxu0 %v412
    %458 = vmatprep.subr.mxu0 %v415
    %459 = vmatpush1.msra.mxu0 %v414
    %460 = vmatprep.subr.mxu0 %v417
    %461 = vmatpush1.msra.mxu0 %v416
    %462 = vmatprep.subr.mxu0 %v419
    %463 = vmatpush1.msra.mxu0 %v418
    %464 = vmatprep.subr.mxu0 0.0
    %465 = vmatpush1.msra.mxu0 0.0
    %466 = vmatprep.subr.mxu0 0.0
    %467 = vmatpush1.msra.mxu0 0.0
    %468 = vmatprep.subr.mxu0 0.0
    %469 = vmatpush1.msra.mxu0 0.0
    %470 = vmatprep.subr.mxu0 0.0
    %471 = vmatpush1.msra.mxu0 0.0
    %472 = vmatprep.subr.mxu0 0.0
    %473 = vmatpush1.msra.mxu0 0.0
    %474 = vmatprep.subr.mxu0 0.0
    %475 = vmatpush1.msra.mxu0 0.0
    %476 = vmatprep.subr.mxu0 0.0
    %477 = vmatpush1.msra.mxu0 0.0
    %478 = vmatprep.subr.mxu0 0.0
    %479 = vmatpush1.msra.mxu0 0.0
    %480 = vmatprep.subr.mxu0 0.0
    %481 = vmatpush1.msra.mxu0 0.0
    %482 = vmatprep.subr.mxu0 0.0
    %483 = vmatpush1.msra.mxu0 0.0
    %484 = vmatprep.subr.mxu0 0.0
    %485 = vmatpush1.msra.mxu0 0.0
    %486 = vmatprep.subr.mxu0 0.0
    %487 = vmatpush1.msra.mxu0 0.0
    %488 = vmatprep.subr.mxu0 0.0
    %489 = vmatpush1.msra.mxu0 0.0
    %490 = vmatprep.subr.mxu0 0.0
    %491 = vmatpush1.msra.mxu0 0.0
    %492 = vmatprep.subr.mxu0 0.0
    %493 = vmatpush1.msra.mxu0 0.0
    %494 = vmatprep.subr.mxu0 0.0
    %495 = vmatpush1.msra.mxu0 0.0
    %496 = vmatprep.mubr.f32.mxu0 0.0
    %497 = vmatmul.mubr.f32.gmra.mrb[0].mxu0 %v387
    %v498 = vpop.f32.mrb[0].mxu0
    %v499 = vadd.f32 %v425, %v498
    %v500 = vpop.f32.mrb[0].mxu0
    %v501 = vadd.f32 %v429, %v500
    %502 = vdwg.mxu0
    %v503 = vmax.f32 %v499, 0.0
    %v504 = vmax.f32 %v501, 0.0
    %v505 = vld [vmem:[#allocation10] sm:$0xff]
    %v506 = vld [vmem:[#allocation10 + $0x8] sm:$0xff]
    %v507 = vld [vmem:[#allocation10 + $0x10] sm:$0xff]
    %v508 = vld [vmem:[#allocation10 + $0x18] sm:$0xff]
    %v509 = vld [vmem:[#allocation10 + $0x20] sm:$0xff]
    %v510 = vld [vmem:[#allocation10 + $0x28] sm:$0xff]
    %v511 = vld [vmem:[#allocation10 + $0x30] sm:$0xff]
    %v512 = vld [vmem:[#allocation10 + $0x38] sm:$0xff]
    %v513 = vld [vmem:[#allocation10 + $0x40] sm:$0xff]
    %v514 = vld [vmem:[#allocation10 + $0x48] sm:$0xff]
    %v515 = vld [vmem:[#allocation10 + $0x50] sm:$0xff]
    %v516 = vld [vmem:[#allocation10 + $0x58] sm:$0xff]
    %v517 = vld [vmem:[#allocation10 + $0x60] sm:$0xff]
    %v518 = vld [vmem:[#allocation10 + $0x68] sm:$0xff]
    %v519 = vld [vmem:[#allocation10 + $0x70] sm:$0xff]
    %v520 = vld [vmem:[#allocation10 + $0x78] sm:$0xff]
    %v521 = vld [vmem:[#allocation10 + $0x80] sm:$0xff]
    %v522 = vld [vmem:[#allocation10 + $0x88] sm:$0xff]
    %v523 = vld [vmem:[#allocation10 + $0x90] sm:$0xff]
    %v524 = vld [vmem:[#allocation10 + $0x98] sm:$0xff]
    %v525 = vld [vmem:[#allocation10 + $0xa0] sm:$0xff]
    %v526 = vld [vmem:[#allocation10 + $0xa8] sm:$0xff]
    %v527 = vld [vmem:[#allocation10 + $0xb0] sm:$0xff]
    %v528 = vld [vmem:[#allocation10 + $0xb8] sm:$0xff]
    %v529 = vld [vmem:[#allocation10 + $0xc0] sm:$0xff]
    %v530 = vld [vmem:[#allocation10 + $0xc8] sm:$0xff]
    %v531 = vld [vmem:[#allocation10 + $0xd0] sm:$0xff]
    %v532 = vld [vmem:[#allocation10 + $0xd8] sm:$0xff]
    %v533 = vld [vmem:[#allocation10 + $0xe0] sm:$0xff]
    %v534 = vld [vmem:[#allocation10 + $0xe8] sm:$0xff]
    %v535 = vld [vmem:[#allocation10 + $0xf0] sm:$0xff]
    %v536 = vld [vmem:[#allocation10 + $0xf8] sm:$0xff]
    %v537 = vld [vmem:[%s12] sm:$0x1]
    %v539 = vlaneseq
    %v540 = vshrl.u32 %v539, 7
    %v541 = vsub.s32 0, %v540
    %v542 = vrot.slane %v537, %v541
    %544 = vmatprep.subr.mxu0 0.0
    %545 = vmatpush1.msra.mxu0 %v505
    %546 = vmatprep.subr.mxu0 0.0
    %547 = vmatpush1.msra.mxu0 %v506
    %548 = vmatprep.subr.mxu0 0.0
    %549 = vmatpush1.msra.mxu0 %v507
    %550 = vmatprep.subr.mxu0 0.0
    %551 = vmatpush1.msra.mxu0 %v508
    %552 = vmatprep.subr.mxu0 0.0
    %553 = vmatpush1.msra.mxu0 %v509
    %554 = vmatprep.subr.mxu0 0.0
    %555 = vmatpush1.msra.mxu0 %v510
    %556 = vmatprep.subr.mxu0 0.0
    %557 = vmatpush1.msra.mxu0 %v511
    %558 = vmatprep.subr.mxu0 0.0
    %559 = vmatpush1.msra.mxu0 %v512
    %560 = vmatprep.subr.mxu0 0.0
    %561 = vmatpush1.msra.mxu0 %v513
    %562 = vmatprep.subr.mxu0 0.0
    %563 = vmatpush1.msra.mxu0 %v514
    %564 = vmatprep.subr.mxu0 0.0
    %565 = vmatpush1.msra.mxu0 %v515
    %566 = vmatprep.subr.mxu0 0.0
    %567 = vmatpush1.msra.mxu0 %v516
    %568 = vmatprep.subr.mxu0 0.0
    %569 = vmatpush1.msra.mxu0 %v517
    %570 = vmatprep.subr.mxu0 0.0
    %571 = vmatpush1.msra.mxu0 %v518
    %572 = vmatprep.subr.mxu0 0.0
    %573 = vmatpush1.msra.mxu0 %v519
    %574 = vmatprep.subr.mxu0 0.0
    %575 = vmatpush1.msra.mxu0 %v520
    %576 = vmatprep.subr.mxu0 0.0
    %577 = vmatpush1.msra.mxu0 %v521
    %578 = vmatprep.subr.mxu0 0.0
    %579 = vmatpush1.msra.mxu0 %v522
    %580 = vmatprep.subr.mxu0 0.0
    %581 = vmatpush1.msra.mxu0 %v523
    %582 = vmatprep.subr.mxu0 0.0
    %583 = vmatpush1.msra.mxu0 %v524
    %584 = vmatprep.subr.mxu0 0.0
    %585 = vmatpush1.msra.mxu0 %v525
    %586 = vmatprep.subr.mxu0 0.0
    %587 = vmatpush1.msra.mxu0 %v526
    %588 = vmatprep.subr.mxu0 0.0
    %589 = vmatpush1.msra.mxu0 %v527
    %590 = vmatprep.subr.mxu0 0.0
    %591 = vmatpush1.msra.mxu0 %v528
    %592 = vmatprep.subr.mxu0 0.0
    %593 = vmatpush1.msra.mxu0 %v529
    %594 = vmatprep.subr.mxu0 0.0
    %595 = vmatpush1.msra.mxu0 %v530
    %596 = vmatprep.subr.mxu0 0.0
    %597 = vmatpush1.msra.mxu0 %v531
    %598 = vmatprep.subr.mxu0 0.0
    %599 = vmatpush1.msra.mxu0 %v532
    %600 = vmatprep.subr.mxu0 0.0
    %601 = vmatpush1.msra.mxu0 %v533
    %602 = vmatprep.subr.mxu0 0.0
    %603 = vmatpush1.msra.mxu0 %v534
    %604 = vmatprep.subr.mxu0 0.0
    %605 = vmatpush1.msra.mxu0 %v535
    %606 = vmatprep.subr.mxu0 0.0
    %607 = vmatpush1.msra.mxu0 %v536
    %608 = vmatprep.mubr.f32.mxu0 %v504
    %609 = vmatmul.mubr.f32.gmra.mrb[0].mxu0 %v503
    %v610 = vpop.f32.mrb[0].mxu0
    %v611 = vadd.f32 %v542, %v610
    %v612 = vpop.f32.mrb[0].mxu0
    %613 = vdwg.mxu0
    %v614 = vxor.u32 %v611, 2147483648
    %v615 = vmul.f32 %v614, 1.442695
    %v616 = vpow.pop %v615
    %v617 = vadd.f32 %v616, 1.0
    %v618 = vrcp.pop %v617
    %v619 = vmul.f32 1.0, %v618
    %620 = vst [vmem:[#allocation11] sm:$0xff] %v619
    // Predicated region
    $region74: #{run_fused.1} parent=1 // pred_check
      _
    $region75: #{run_fused.1} parent=1 // pred_check_branch
      %622 = sbr.rel (0) target = $region77
    $region76: #{run_fused.1} parent=1 // pred_region
      %s624 = ssub.s32 128, 128
      %625 = vsyncadd [#allocation4], %s624
      %s627 = sshll.u32 [#allocation11], 4
      %s628 = int_to_ptr.vmem [resolvable:$true] %s627
      %630 = dma.vmem_to_hbm [thread:$0]  %s628, 128, %s13, [#allocation4]
    $region77: #{run_fused.1} parent=1 // pred_fallthru
      _
    // Predicated region
    $region78: #{run_fused.1} parent=1 // pred_check
      _
    $region79: #{run_fused.1} parent=1 // pred_check_branch
      %632 = sbr.rel (0) target = $region81
    $region80: #{run_fused.1} parent=1 // pred_region
      %633 = dma.done [#allocation4], 128
    $region81: #{run_fused.1} parent=1 // pred_fallthru
      _
    %634 = vsyncpa [#allocation3], 1
    %635 = vsyncpa [#allocation6], 1
    %636 = vsyncpa [#allocation9], 1
    %637 = vsyncpa [#allocation4], 1

</llo_original>
